<compile_context>
chip_gen: v6e
topology: v6e:2x2x1
jax: 0.10.0
libtpu: 0.0.40
codegen_flags: <defaults>
</compile_context>

<pallas_src>
import math
import jax
import jax.numpy as jnp
from jax import lax
from jax.experimental import pallas as pl
from jax.experimental.pallas import tpu as pltpu


def _round_up(n: int, m: int) -> int:
    return ((n + m - 1) // m) * m


def _make_attention_kernel(num_heads: int, head_size: int, hidden: int,
                           seq_len: int, seq_pad: int, tq: int,
                           approx_recip: bool):
    def kernel(x_ref, wqkv_ref, bqkv_ref, o_ref,
               q_scr, k_scr, v_scr, ctx_scr):
        # x_ref   : (1, S_pad, D_in)   full (padded) sequence, compute dtype
        # wqkv_ref: (D_in, 3H)         [Q*scale | K | V] fused, compute dtype
        # bqkv_ref: (1, 3H)            fused bias (f32, added to f32 accum)
        # o_ref   : (1, TQ, H)
        # q_scr/k_scr/v_scr : (nh, S_pad, d) head-split projection cache
        # ctx_scr : (TQ, H) f32 staging buffer for one lane-dense store
        qi = pl.program_id(1)

        # ---- One wide QKV projection per batch element (cached in VMEM). ----
        @pl.when(qi == 0)
        def _project():
            qkv = jnp.dot(x_ref[0], wqkv_ref[...],
                          preferred_element_type=jnp.float32) + bqkv_ref[...]
            for h in range(num_heads):          # static, small; once per batch
                lo = h * head_size
                hi = lo + head_size
                q_scr[h] = qkv[:, lo:hi].astype(q_scr.dtype)
                k_scr[h] = qkv[:, hidden + lo:hidden + hi].astype(k_scr.dtype)
                v_scr[h] = qkv[:, 2 * hidden + lo:2 * hidden + hi].astype(v_scr.dtype)

        # ---- Heads-batched attention for this query tile. ----
        q_start = pl.multiple_of(qi * tq, tq)
        q = q_scr[:, pl.ds(q_start, tq), :]      # (nh, TQ, d)  pre-scaled
        k = k_scr[...]                           # (nh, S_pad, d)
        v = v_scr[...]                           # (nh, S_pad, d)

        s = jnp.einsum("hqd,hkd->hqk", q, k,
                       preferred_element_type=jnp.float32)   # (nh, TQ, S_pad)

        if seq_pad > seq_len:
            # Mask padded key columns (padded query rows are sliced off later).
            key_idx = lax.broadcasted_iota(jnp.int32, (1, 1, seq_pad), 2)
            s = jnp.where(key_idx < seq_len, s, jnp.float32(-1e30))

        # Softmax kept in f32 (v5e has no bf16 VPU/EUP path).
        m = jnp.max(s, axis=-1, keepdims=True)
        p = jnp.exp(s - m)
        denom = jnp.sum(p, axis=-1, keepdims=True)

        # Deferred normalization: matmul unnormalized probs, then scale the
        # small (nh, TQ, d) context by the reciprocal denominator.
        ctx = jnp.einsum("hqk,hkd->hqd", p.astype(v.dtype), v,
                         preferred_element_type=jnp.float32)  # (nh, TQ, d)
        ctx = ctx * pl.reciprocal(denom, approx=approx_recip)

        # Re-merge heads into a (TQ, H) staging scratch, then one dense store.
        for h in range(num_heads):
            lo = h * head_size
            ctx_scr[:, lo:lo + head_size] = ctx[h]
        o_ref[0] = ctx_scr[...].astype(o_ref.dtype)

    return kernel


def self_attention(x, wq, bq, wk, bk, wv, bv, *, num_heads,
                   compute_dtype=jnp.bfloat16, tq=128):
    """x: (B, S, D_in); w*: (D_in, H); b*: (H,).  Returns (B, S, H).

    compute_dtype: dtype of the MXU operands (bf16 by default; f32 for an
    exact-semantics path).  Accumulation / softmax always f32.
    tq: query tile rows (multiple of 8).  128 default; bump to 256–512 on v6e.
    """
    B, S, D_in = x.shape
    H = wq.shape[1]
    assert H % num_heads == 0
    assert tq >= 8 and tq % 8 == 0
    head_size = H // num_heads
    scale = 1.0 / math.sqrt(head_size)
    out_dtype = x.dtype

    # Fuse Q/K/V into one (D_in, 3H) operand; fold the softmax scale into Q.
    wqkv = jnp.concatenate([wq * scale, wk, wv], axis=1).astype(compute_dtype)
    bqkv = jnp.concatenate([bq * scale, bk, bv]).reshape(1, 3 * H).astype(jnp.float32)
    x_c = x.astype(compute_dtype)

    # Query tiling: pad S to a multiple of the tile (mask padded keys in-kernel)
    # instead of falling back to a single (S, S) grid step.
    TQ = tq if S >= tq else _round_up(S, 8)
    S_pad = _round_up(S, TQ)
    if S_pad > S:
        x_c = jnp.pad(x_c, ((0, 0), (0, S_pad - S), (0, 0)))
    nq = S_pad // TQ

    approx_recip = compute_dtype != jnp.float32
    kernel = _make_attention_kernel(num_heads, head_size, H, S, S_pad, TQ,
                                    approx_recip)

    # Constant-index operands (weights / bias): request single buffering so
    # they are not double-buffered (VMEM headroom, esp. v7x's 64 MiB).
    def _resident_spec(shape):
        index_map = lambda b, qi: (0, 0)
        try:
            return pl.BlockSpec(shape, index_map, pipeline_mode=pl.Buffered(1))
        except (TypeError, AttributeError):   # older jax without pipeline_mode
            return pl.BlockSpec(shape, index_map)

    out = pl.pallas_call(
        kernel,
        out_shape=jax.ShapeDtypeStruct((B, S_pad, H), out_dtype),
        grid_spec=pltpu.PrefetchScalarGridSpec(
            num_scalar_prefetch=0,
            grid=(B, nq),                       # batch outer, query tiles inner
            in_specs=[
                pl.BlockSpec((1, S_pad, D_in), lambda b, qi: (b, 0, 0)),  # x
                _resident_spec((D_in, 3 * H)),                            # wqkv
                _resident_spec((1, 3 * H)),                               # bqkv
            ],
            out_specs=pl.BlockSpec((1, TQ, H), lambda b, qi: (b, qi, 0)),
            scratch_shapes=[
                pltpu.VMEM((num_heads, S_pad, head_size), compute_dtype),  # q
                pltpu.VMEM((num_heads, S_pad, head_size), compute_dtype),  # k
                pltpu.VMEM((num_heads, S_pad, head_size), compute_dtype),  # v
                pltpu.VMEM((TQ, H), jnp.float32),                          # ctx
            ],
        ),
        compiler_params=pltpu.CompilerParams(
            # batch parallel (megacore on v7x); qi carries the kv-cache state.
            dimension_semantics=("parallel", "arbitrary"),
            vmem_limit_bytes=64 * 1024 * 1024,
        ),
    )(x_c, wqkv, bqkv)

    return out[:, :S, :] if S_pad > S else out


def self_attention_reference(x, wq, bq, wk, bk, wv, bv, *, num_heads):
    """Pure-JAX reference mirroring the PyTorch module exactly (f32)."""
    B, S, D_in = x.shape
    H = wq.shape[1]
    d = H // num_heads

    def heads(t):  # (B, S, H) -> (B, nh, S, d)
        return t.reshape(B, S, num_heads, d).transpose(0, 2, 1, 3)

    q = heads(x @ wq + bq)
    k = heads(x @ wk + bk)
    v = heads(x @ wv + bv)
    scores = jnp.einsum("bhqd,bhkd->bhqk", q, k) / math.sqrt(d)
    probs = jax.nn.softmax(scores, axis=-1)
    ctx = jnp.einsum("bhqk,bhkd->bhqd", probs, v)
    return ctx.transpose(0, 2, 1, 3).reshape(B, S, H)


if __name__ == "__main__":
    B, S = 2, 8
    input_size = 32
    hidden_size = 32
    num_heads = 4

    key = jax.random.PRNGKey(0)
    kx, kq, kbq, kk, kbk, kv, kbv = jax.random.split(key, 7)

    bound = 1.0 / math.sqrt(input_size)
    x = jax.random.normal(kx, (B, S, input_size), dtype=jnp.float32)
    wq = jax.random.uniform(kq, (input_size, hidden_size), jnp.float32, -bound, bound)
    bq = jax.random.uniform(kbq, (hidden_size,), jnp.float32, -bound, bound)
    wk = jax.random.uniform(kk, (input_size, hidden_size), jnp.float32, -bound, bound)
    bk = jax.random.uniform(kbk, (hidden_size,), jnp.float32, -bound, bound)
    wv = jax.random.uniform(kv, (input_size, hidden_size), jnp.float32, -bound, bound)
    bv = jax.random.uniform(kbv, (hidden_size,), jnp.float32, -bound, bound)

    ref = self_attention_reference(x, wq, bq, wk, bk, wv, bv, num_heads=num_heads)

    # 1) Exact-semantics path (f32 operands, exact reciprocal).
    out_f32 = self_attention(x, wq, bq, wk, bk, wv, bv, num_heads=num_heads,
                             compute_dtype=jnp.float32)
    out_f32 = jax.block_until_ready(out_f32)
    assert out_f32.shape == (B, S, hidden_size)
    assert jnp.allclose(out_f32, ref, atol=1e-4, rtol=1e-4), "f32 path mismatch"

    # 2) Default performance path (bf16 MXU operands, approx reciprocal).
    out_bf16 = self_attention(x, wq, bq, wk, bk, wv, bv, num_heads=num_heads)
    out_bf16 = jax.block_until_ready(out_bf16)
    assert out_bf16.shape == (B, S, hidden_size)
    assert jnp.allclose(out_bf16, ref, atol=3e-2, rtol=3e-2), "bf16 path mismatch"

    # 3) Ragged-sequence path: S not a multiple of the query tile -> padded S,
    #    masked keys, multiple query tiles reusing the cached KV projection.
    S2 = 12
    x2 = jax.random.normal(kx, (B, S2, input_size), dtype=jnp.float32)
    ref2 = self_attention_reference(x2, wq, bq, wk, bk, wv, bv, num_heads=num_heads)
    out2 = self_attention(x2, wq, bq, wk, bk, wv, bv, num_heads=num_heads,
                          compute_dtype=jnp.float32, tq=8)
    out2 = jax.block_until_ready(out2)
    assert out2.shape == (B, S2, hidden_size)
    assert jnp.allclose(out2, ref2, atol=1e-4, rtol=1e-4), "padded path mismatch"

    print("KERNEL_OK")
</pallas_src>

<mosaic_0001>
module attributes {stable_mosaic.version = 11 : i64} {
  func.func @kernel(%arg0: i32, %arg1: i32, %arg2: memref<1x8x32xf32, #tpu.memory_space<vmem>>, %arg3: memref<32x96xf32, #tpu.memory_space<vmem>>, %arg4: memref<1x96xf32, #tpu.memory_space<vmem>>, %arg5: memref<1x8x32xf32, #tpu.memory_space<vmem>>, %arg6: memref<4x8x8xf32, #tpu.memory_space<vmem>>, %arg7: memref<4x8x8xf32, #tpu.memory_space<vmem>>, %arg8: memref<4x8x8xf32, #tpu.memory_space<vmem>>, %arg9: memref<8x32xf32, #tpu.memory_space<vmem>>) attributes {dimension_semantics = [#tpu.dimension_semantics<parallel>, #tpu.dimension_semantics<arbitrary>], iteration_bounds = array<i64: 2, 1>, scalar_prefetch = 0 : i64, scratch_operands = 4 : i64, tpu.core_type = #tpu.core_type<tc>, window_params = [{transform_indices = @transform_0, window_bounds = array<i64: 1, 8, 32>}, {pipeline_mode = #tpu.pipeline_mode<synchronous>, transform_indices = @transform_1, window_bounds = array<i64: 32, 96>}, {pipeline_mode = #tpu.pipeline_mode<synchronous>, transform_indices = @transform_2, window_bounds = array<i64: 1, 96>}, {transform_indices = @transform_3, window_bounds = array<i64: 1, 8, 32>}]} {
    %c0_i32 = arith.constant 0 : i32
    %0 = arith.cmpi eq, %arg1, %c0_i32 : i32
    %1 = arith.extui %0 : i1 to i32
    %c0_i32_0 = arith.constant 0 : i32
    %2 = arith.cmpi ne, %1, %c0_i32_0 : i32
    scf.if %2 {
      %c0_21 = arith.constant 0 : index
      %c0_22 = arith.constant 0 : index
      %c0_23 = arith.constant 0 : index
      %37 = vector.load %arg2[%c0_21, %c0_22, %c0_23] : memref<1x8x32xf32, #tpu.memory_space<vmem>>, vector<1x8x32xf32>
      %38 = vector.shape_cast %37 : vector<1x8x32xf32> to vector<8x32xf32>
      %c0_24 = arith.constant 0 : index
      %c0_25 = arith.constant 0 : index
      %39 = vector.load %arg3[%c0_24, %c0_25] : memref<32x96xf32, #tpu.memory_space<vmem>>, vector<32x96xf32>
      %cst_26 = arith.constant dense<0.000000e+00> : vector<8x96xf32>
      %40 = tpu.matmul %38, %39, %cst_26 {dimension_numbers = #tpu.dot_dimension_numbers<[1], [0], [0], [1], [0, 0, 1, 1], [], []>} : vector<8x32xf32>, vector<32x96xf32>, vector<8x96xf32> -> vector<8x96xf32>
      %c0_27 = arith.constant 0 : index
      %c0_28 = arith.constant 0 : index
      %41 = vector.load %arg4[%c0_27, %c0_28] : memref<1x96xf32, #tpu.memory_space<vmem>>, vector<1x96xf32>
      %42 = vector.broadcast %41 : vector<1x96xf32> to vector<8x96xf32>
      %43 = arith.addf %40, %42 : vector<8x96xf32>
      %44 = vector.extract_strided_slice %43 {offsets = [0, 0], sizes = [8, 8], strides = [1, 1]} : vector<8x96xf32> to vector<8x8xf32>
      %c0_29 = arith.constant 0 : index
      %c0_30 = arith.constant 0 : index
      %c0_31 = arith.constant 0 : index
      %45 = vector.load %arg6[%c0_29, %c0_30, %c0_31] : memref<4x8x8xf32, #tpu.memory_space<vmem>>, vector<1x8x8xf32>
      %46 = vector.shape_cast %45 : vector<1x8x8xf32> to vector<8x8xf32>
      %47 = vector.shape_cast %44 : vector<8x8xf32> to vector<1x8x8xf32>
      tpu.vector_store %arg6[%c0_29, %c0_30, %c0_31], %47 {strides = array<i32>} : memref<4x8x8xf32, #tpu.memory_space<vmem>>, vector<1x8x8xf32>,
      %48 = vector.extract_strided_slice %43 {offsets = [0, 32], sizes = [8, 8], strides = [1, 1]} : vector<8x96xf32> to vector<8x8xf32>
      %c0_32 = arith.constant 0 : index
      %c0_33 = arith.constant 0 : index
      %c0_34 = arith.constant 0 : index
      %49 = vector.load %arg7[%c0_32, %c0_33, %c0_34] : memref<4x8x8xf32, #tpu.memory_space<vmem>>, vector<1x8x8xf32>
      %50 = vector.shape_cast %49 : vector<1x8x8xf32> to vector<8x8xf32>
      %51 = vector.shape_cast %48 : vector<8x8xf32> to vector<1x8x8xf32>
      tpu.vector_store %arg7[%c0_32, %c0_33, %c0_34], %51 {strides = array<i32>} : memref<4x8x8xf32, #tpu.memory_space<vmem>>, vector<1x8x8xf32>,
      %52 = vector.extract_strided_slice %43 {offsets = [0, 64], sizes = [8, 8], strides = [1, 1]} : vector<8x96xf32> to vector<8x8xf32>
      %c0_35 = arith.constant 0 : index
      %c0_36 = arith.constant 0 : index
      %c0_37 = arith.constant 0 : index
      %53 = vector.load %arg8[%c0_35, %c0_36, %c0_37] : memref<4x8x8xf32, #tpu.memory_space<vmem>>, vector<1x8x8xf32>
      %54 = vector.shape_cast %53 : vector<1x8x8xf32> to vector<8x8xf32>
      %55 = vector.shape_cast %52 : vector<8x8xf32> to vector<1x8x8xf32>
      tpu.vector_store %arg8[%c0_35, %c0_36, %c0_37], %55 {strides = array<i32>} : memref<4x8x8xf32, #tpu.memory_space<vmem>>, vector<1x8x8xf32>,
      %56 = vector.extract_strided_slice %43 {offsets = [0, 8], sizes = [8, 8], strides = [1, 1]} : vector<8x96xf32> to vector<8x8xf32>
      %c1 = arith.constant 1 : index
      %c0_38 = arith.constant 0 : index
      %c0_39 = arith.constant 0 : index
      %57 = vector.load %arg6[%c1, %c0_38, %c0_39] : memref<4x8x8xf32, #tpu.memory_space<vmem>>, vector<1x8x8xf32>
      %58 = vector.shape_cast %57 : vector<1x8x8xf32> to vector<8x8xf32>
      %59 = vector.shape_cast %56 : vector<8x8xf32> to vector<1x8x8xf32>
      tpu.vector_store %arg6[%c1, %c0_38, %c0_39], %59 {strides = array<i32>} : memref<4x8x8xf32, #tpu.memory_space<vmem>>, vector<1x8x8xf32>,
      %60 = vector.extract_strided_slice %43 {offsets = [0, 40], sizes = [8, 8], strides = [1, 1]} : vector<8x96xf32> to vector<8x8xf32>
      %c1_40 = arith.constant 1 : index
      %c0_41 = arith.constant 0 : index
      %c0_42 = arith.constant 0 : index
      %61 = vector.load %arg7[%c1_40, %c0_41, %c0_42] : memref<4x8x8xf32, #tpu.memory_space<vmem>>, vector<1x8x8xf32>
      %62 = vector.shape_cast %61 : vector<1x8x8xf32> to vector<8x8xf32>
      %63 = vector.shape_cast %60 : vector<8x8xf32> to vector<1x8x8xf32>
      tpu.vector_store %arg7[%c1_40, %c0_41, %c0_42], %63 {strides = array<i32>} : memref<4x8x8xf32, #tpu.memory_space<vmem>>, vector<1x8x8xf32>,
      %64 = vector.extract_strided_slice %43 {offsets = [0, 72], sizes = [8, 8], strides = [1, 1]} : vector<8x96xf32> to vector<8x8xf32>
      %c1_43 = arith.constant 1 : index
      %c0_44 = arith.constant 0 : index
      %c0_45 = arith.constant 0 : index
      %65 = vector.load %arg8[%c1_43, %c0_44, %c0_45] : memref<4x8x8xf32, #tpu.memory_space<vmem>>, vector<1x8x8xf32>
      %66 = vector.shape_cast %65 : vector<1x8x8xf32> to vector<8x8xf32>
      %67 = vector.shape_cast %64 : vector<8x8xf32> to vector<1x8x8xf32>
      tpu.vector_store %arg8[%c1_43, %c0_44, %c0_45], %67 {strides = array<i32>} : memref<4x8x8xf32, #tpu.memory_space<vmem>>, vector<1x8x8xf32>,
      %68 = vector.extract_strided_slice %43 {offsets = [0, 16], sizes = [8, 8], strides = [1, 1]} : vector<8x96xf32> to vector<8x8xf32>
      %c2 = arith.constant 2 : index
      %c0_46 = arith.constant 0 : index
      %c0_47 = arith.constant 0 : index
      %69 = vector.load %arg6[%c2, %c0_46, %c0_47] : memref<4x8x8xf32, #tpu.memory_space<vmem>>, vector<1x8x8xf32>
      %70 = vector.shape_cast %69 : vector<1x8x8xf32> to vector<8x8xf32>
      %71 = vector.shape_cast %68 : vector<8x8xf32> to vector<1x8x8xf32>
      tpu.vector_store %arg6[%c2, %c0_46, %c0_47], %71 {strides = array<i32>} : memref<4x8x8xf32, #tpu.memory_space<vmem>>, vector<1x8x8xf32>,
      %72 = vector.extract_strided_slice %43 {offsets = [0, 48], sizes = [8, 8], strides = [1, 1]} : vector<8x96xf32> to vector<8x8xf32>
      %c2_48 = arith.constant 2 : index
      %c0_49 = arith.constant 0 : index
      %c0_50 = arith.constant 0 : index
      %73 = vector.load %arg7[%c2_48, %c0_49, %c0_50] : memref<4x8x8xf32, #tpu.memory_space<vmem>>, vector<1x8x8xf32>
      %74 = vector.shape_cast %73 : vector<1x8x8xf32> to vector<8x8xf32>
      %75 = vector.shape_cast %72 : vector<8x8xf32> to vector<1x8x8xf32>
      tpu.vector_store %arg7[%c2_48, %c0_49, %c0_50], %75 {strides = array<i32>} : memref<4x8x8xf32, #tpu.memory_space<vmem>>, vector<1x8x8xf32>,
      %76 = vector.extract_strided_slice %43 {offsets = [0, 80], sizes = [8, 8], strides = [1, 1]} : vector<8x96xf32> to vector<8x8xf32>
      %c2_51 = arith.constant 2 : index
      %c0_52 = arith.constant 0 : index
      %c0_53 = arith.constant 0 : index
      %77 = vector.load %arg8[%c2_51, %c0_52, %c0_53] : memref<4x8x8xf32, #tpu.memory_space<vmem>>, vector<1x8x8xf32>
      %78 = vector.shape_cast %77 : vector<1x8x8xf32> to vector<8x8xf32>
      %79 = vector.shape_cast %76 : vector<8x8xf32> to vector<1x8x8xf32>
      tpu.vector_store %arg8[%c2_51, %c0_52, %c0_53], %79 {strides = array<i32>} : memref<4x8x8xf32, #tpu.memory_space<vmem>>, vector<1x8x8xf32>,
      %80 = vector.extract_strided_slice %43 {offsets = [0, 24], sizes = [8, 8], strides = [1, 1]} : vector<8x96xf32> to vector<8x8xf32>
      %c3 = arith.constant 3 : index
      %c0_54 = arith.constant 0 : index
      %c0_55 = arith.constant 0 : index
      %81 = vector.load %arg6[%c3, %c0_54, %c0_55] : memref<4x8x8xf32, #tpu.memory_space<vmem>>, vector<1x8x8xf32>
      %82 = vector.shape_cast %81 : vector<1x8x8xf32> to vector<8x8xf32>
      %83 = vector.shape_cast %80 : vector<8x8xf32> to vector<1x8x8xf32>
      tpu.vector_store %arg6[%c3, %c0_54, %c0_55], %83 {strides = array<i32>} : memref<4x8x8xf32, #tpu.memory_space<vmem>>, vector<1x8x8xf32>,
      %84 = vector.extract_strided_slice %43 {offsets = [0, 56], sizes = [8, 8], strides = [1, 1]} : vector<8x96xf32> to vector<8x8xf32>
      %c3_56 = arith.constant 3 : index
      %c0_57 = arith.constant 0 : index
      %c0_58 = arith.constant 0 : index
      %85 = vector.load %arg7[%c3_56, %c0_57, %c0_58] : memref<4x8x8xf32, #tpu.memory_space<vmem>>, vector<1x8x8xf32>
      %86 = vector.shape_cast %85 : vector<1x8x8xf32> to vector<8x8xf32>
      %87 = vector.shape_cast %84 : vector<8x8xf32> to vector<1x8x8xf32>
      tpu.vector_store %arg7[%c3_56, %c0_57, %c0_58], %87 {strides = array<i32>} : memref<4x8x8xf32, #tpu.memory_space<vmem>>, vector<1x8x8xf32>,
      %88 = vector.extract_strided_slice %43 {offsets = [0, 88], sizes = [8, 8], strides = [1, 1]} : vector<8x96xf32> to vector<8x8xf32>
      %c3_59 = arith.constant 3 : index
      %c0_60 = arith.constant 0 : index
      %c0_61 = arith.constant 0 : index
      %89 = vector.load %arg8[%c3_59, %c0_60, %c0_61] : memref<4x8x8xf32, #tpu.memory_space<vmem>>, vector<1x8x8xf32>
      %90 = vector.shape_cast %89 : vector<1x8x8xf32> to vector<8x8xf32>
      %91 = vector.shape_cast %88 : vector<8x8xf32> to vector<1x8x8xf32>
      tpu.vector_store %arg8[%c3_59, %c0_60, %c0_61], %91 {strides = array<i32>} : memref<4x8x8xf32, #tpu.memory_space<vmem>>, vector<1x8x8xf32>,
    } else {
    }
    %c8_i32 = arith.constant 8 : i32
    %3 = arith.muli %arg1, %c8_i32 : i32
    %4 = tpu.assume_multiple %3, 8 : i32
    %c0 = arith.constant 0 : index
    %5 = arith.index_cast %4 : i32 to index
    %c0_1 = arith.constant 0 : index
    %6 = vector.load %arg6[%c0, %5, %c0_1] : memref<4x8x8xf32, #tpu.memory_space<vmem>>, vector<4x8x8xf32>
    %c0_2 = arith.constant 0 : index
    %c0_3 = arith.constant 0 : index
    %c0_4 = arith.constant 0 : index
    %7 = vector.load %arg7[%c0_2, %c0_3, %c0_4] : memref<4x8x8xf32, #tpu.memory_space<vmem>>, vector<4x8x8xf32>
    %c0_5 = arith.constant 0 : index
    %c0_6 = arith.constant 0 : index
    %c0_7 = arith.constant 0 : index
    %8 = vector.load %arg8[%c0_5, %c0_6, %c0_7] : memref<4x8x8xf32, #tpu.memory_space<vmem>>, vector<4x8x8xf32>
    "tpu.trace_start"() <{level = 10 : i32, message = "hqd,hkd->hqk"}> : () -> ()
    %cst = arith.constant dense<0.000000e+00> : vector<4x8x8xf32>
    %9 = tpu.matmul %6, %7, %cst {dimension_numbers = #tpu.dot_dimension_numbers<[2], [2], [1], [1], [0, 0, 0, 1, 1, 1], [0], [0]>} : vector<4x8x8xf32>, vector<4x8x8xf32>, vector<4x8x8xf32> -> vector<4x8x8xf32>
    "tpu.trace_stop"() : () -> ()
    %cst_8 = arith.constant dense<0xFF800000> : vector<4x8xf32>
    %10 = vector.multi_reduction <maximumf>, %9, %cst_8 [2] : vector<4x8x8xf32> to vector<4x8xf32>
    %11 = vector.shape_cast %10 : vector<4x8xf32> to vector<4x8x1xf32>
    %12 = vector.broadcast %11 : vector<4x8x1xf32> to vector<4x8x8xf32>
    %13 = arith.subf %9, %12 : vector<4x8x8xf32>
    %14 = math.exp %13 : vector<4x8x8xf32>
    %cst_9 = arith.constant dense<0.000000e+00> : vector<4x8xf32>
    %15 = vector.multi_reduction <add>, %14, %cst_9 [2] : vector<4x8x8xf32> to vector<4x8xf32>
    %16 = vector.shape_cast %15 : vector<4x8xf32> to vector<4x8x1xf32>
    "tpu.trace_start"() <{level = 10 : i32, message = "hqk,hkd->hqd"}> : () -> ()
    %cst_10 = arith.constant dense<0.000000e+00> : vector<4x8x8xf32>
    %17 = tpu.matmul %14, %8, %cst_10 {dimension_numbers = #tpu.dot_dimension_numbers<[2], [1], [1], [2], [0, 0, 0, 1, 1, 2], [0], [0]>} : vector<4x8x8xf32>, vector<4x8x8xf32>, vector<4x8x8xf32> -> vector<4x8x8xf32>
    "tpu.trace_stop"() : () -> ()
    %18 = tpu.reciprocal %16 : vector<4x8x1xf32> -> vector<4x8x1xf32>
    %19 = vector.broadcast %18 : vector<4x8x1xf32> to vector<4x8x8xf32>
    %20 = arith.mulf %17, %19 : vector<4x8x8xf32>
    %21 = vector.extract_strided_slice %20 {offsets = [0, 0, 0], sizes = [1, 8, 8], strides = [1, 1, 1]} : vector<4x8x8xf32> to vector<1x8x8xf32>
    %22 = vector.shape_cast %21 : vector<1x8x8xf32> to vector<8x8xf32>
    %c0_11 = arith.constant 0 : index
    %c0_12 = arith.constant 0 : index
    %23 = vector.load %arg9[%c0_11, %c0_12] : memref<8x32xf32, #tpu.memory_space<vmem>>, vector<8x8xf32>
    tpu.vector_store %arg9[%c0_11, %c0_12], %22 {strides = array<i32>} : memref<8x32xf32, #tpu.memory_space<vmem>>, vector<8x8xf32>,
    %24 = vector.extract_strided_slice %20 {offsets = [1, 0, 0], sizes = [1, 8, 8], strides = [1, 1, 1]} : vector<4x8x8xf32> to vector<1x8x8xf32>
    %25 = vector.shape_cast %24 : vector<1x8x8xf32> to vector<8x8xf32>
    %c0_13 = arith.constant 0 : index
    %c8 = arith.constant 8 : index
    %26 = vector.load %arg9[%c0_13, %c8] : memref<8x32xf32, #tpu.memory_space<vmem>>, vector<8x8xf32>
    tpu.vector_store %arg9[%c0_13, %c8], %25 {strides = array<i32>} : memref<8x32xf32, #tpu.memory_space<vmem>>, vector<8x8xf32>,
    %27 = vector.extract_strided_slice %20 {offsets = [2, 0, 0], sizes = [1, 8, 8], strides = [1, 1, 1]} : vector<4x8x8xf32> to vector<1x8x8xf32>
    %28 = vector.shape_cast %27 : vector<1x8x8xf32> to vector<8x8xf32>
    %c0_14 = arith.constant 0 : index
    %c16 = arith.constant 16 : index
    %29 = vector.load %arg9[%c0_14, %c16] : memref<8x32xf32, #tpu.memory_space<vmem>>, vector<8x8xf32>
    tpu.vector_store %arg9[%c0_14, %c16], %28 {strides = array<i32>} : memref<8x32xf32, #tpu.memory_space<vmem>>, vector<8x8xf32>,
    %30 = vector.extract_strided_slice %20 {offsets = [3, 0, 0], sizes = [1, 8, 8], strides = [1, 1, 1]} : vector<4x8x8xf32> to vector<1x8x8xf32>
    %31 = vector.shape_cast %30 : vector<1x8x8xf32> to vector<8x8xf32>
    %c0_15 = arith.constant 0 : index
    %c24 = arith.constant 24 : index
    %32 = vector.load %arg9[%c0_15, %c24] : memref<8x32xf32, #tpu.memory_space<vmem>>, vector<8x8xf32>
    tpu.vector_store %arg9[%c0_15, %c24], %31 {strides = array<i32>} : memref<8x32xf32, #tpu.memory_space<vmem>>, vector<8x8xf32>,
    %c0_16 = arith.constant 0 : index
    %c0_17 = arith.constant 0 : index
    %33 = vector.load %arg9[%c0_16, %c0_17] : memref<8x32xf32, #tpu.memory_space<vmem>>, vector<8x32xf32>
    %c0_18 = arith.constant 0 : index
    %c0_19 = arith.constant 0 : index
    %c0_20 = arith.constant 0 : index
    %34 = vector.load %arg5[%c0_18, %c0_19, %c0_20] : memref<1x8x32xf32, #tpu.memory_space<vmem>>, vector<1x8x32xf32>
    %35 = vector.shape_cast %34 : vector<1x8x32xf32> to vector<8x32xf32>
    %36 = vector.shape_cast %33 : vector<8x32xf32> to vector<1x8x32xf32>
    tpu.vector_store %arg5[%c0_18, %c0_19, %c0_20], %36 {strides = array<i32>} : memref<1x8x32xf32, #tpu.memory_space<vmem>>, vector<1x8x32xf32>,
    return
  }
  func.func @transform_0(%arg0: i32, %arg1: i32) -> (i32, i32, i32) {
    %c0_i32 = arith.constant 0 : i32
    %c0_i32_0 = arith.constant 0 : i32
    %c0_i32_1 = arith.constant 0 : i32
    return %arg0, %c0_i32, %c0_i32_0 : i32, i32, i32
  }
  func.func @transform_1(%arg0: i32, %arg1: i32) -> (i32, i32) {
    %c0_i32 = arith.constant 0 : i32
    %c0_i32_0 = arith.constant 0 : i32
    %c0_i32_1 = arith.constant 0 : i32
    return %c0_i32, %c0_i32_0 : i32, i32
  }
  func.func @transform_2(%arg0: i32, %arg1: i32) -> (i32, i32) {
    %c0_i32 = arith.constant 0 : i32
    %c0_i32_0 = arith.constant 0 : i32
    %c0_i32_1 = arith.constant 0 : i32
    return %c0_i32, %c0_i32_0 : i32, i32
  }
  func.func @transform_3(%arg0: i32, %arg1: i32) -> (i32, i32, i32) {
    %c0_i32 = arith.constant 0 : i32
    %c0_i32_0 = arith.constant 0 : i32
    return %arg0, %arg1, %c0_i32 : i32, i32, i32
  }
}

</mosaic_0001>

<llo_original>
// kernel: tpu_custom_call.1
$region0: #{tpu_custom_call.1}
  #allocation0 [shape = 'u32[]', space=smem, size = 0x4, offset = 0x4, fixed_abs, tag = 'smem constant byte address 0x4 - core index']
  #allocation1 [shape = 'u32[144,128]{1,0:T(1,128)}', space=vmem, size = 0x12000, scoped, tag = 'internal scratch']
  #allocation2 [shape = 'f32[4,8,8]{2,1,0:T(8,128)}', space=vmem, size = 0x4000, scoped, tag = 'scratch operand']
  #allocation3 [shape = 'f32[4,8,8]{2,1,0:T(8,128)}', space=vmem, size = 0x4000, scoped, tag = 'scratch operand']
  #allocation4 [shape = 'f32[4,8,8]{2,1,0:T(8,128)}', space=vmem, size = 0x4000, scoped, tag = 'scratch operand']
  #allocation5 [shape = 'f32[8,32]{1,0:T(8,128)}', space=vmem, size = 0x1000, scoped, tag = 'scratch operand']
  %s0 = inlined_call_operand.hbm [shape: f32[2,8,32], index: 0, kind: input, shape index: {}]
  %s1 = inlined_call_operand.hbm [shape: f32[32,96], index: 1, kind: input, shape index: {}]
  %s2 = inlined_call_operand.vmem [shape: f32[1,96], index: 2, kind: input, shape index: {}]
  %s3 = inlined_call_operand.hbm [shape: f32[2,8,32], index: 3, kind: output, shape index: {}]
  %s4 = sld [smem:[#allocation0]]
  $region57: #{tpu_custom_call.1} parent=0
    _
  %s6 = ssub.s32 1, %s4
  %s7 = scalar_select 0, %s6, %s4
  $region1: #{tpu_custom_call.1} parent=0
    #allocation6 [shape = 'u8[8192]{0}', space=vmem, size = 0x2000, scoped, tag = 'input window, operand 0']
    #allocation7 [shape = 's32[2]{0}', space=sflag, size = 0x8, scoped, tag = 'scoped memory for tpu_custom_call.1']
    #allocation8 [shape = 's32[2]{0}', space=sflag, size = 0x8, scoped, tag = 'scoped memory for tpu_custom_call.1']
    #allocation9 [shape = 'u8[16384]{0}', space=vmem, size = 0x4000, scoped, tag = 'input window, operand 1, single buffered']
    #allocation10 [shape = 's32[1]{0}', space=sflag, size = 0x4, scoped, tag = 'scoped memory for tpu_custom_call.1']
    #allocation11 [shape = 'u8[8192]{0}', space=vmem, size = 0x2000, scoped, tag = 'output window, operand 0']
    %8 = vsyncpa [#allocation7], 0
    %s9 = scalar_lea.sflag [#allocation7], 1
    %10 = vsyncpa %s9, 0
    %11 = vsyncpa [#allocation10], 0
    %12 = vsyncpa [#allocation8], 0
    %s13 = scalar_lea.sflag [#allocation8], 1
    %14 = vsyncpa %s13, 0
    loop: start=0, step=1, limit=4
    $region2: #{tpu_custom_call.1} parent=1 // loop_pre_header
      _
    $region3: #{tpu_custom_call.1} parent=1 // loop_header
      %s16 = sphi 0, %s20
      %p17 = scmp.ge.s32.totalorder %s16, 4
      %s23 = sphi 0, %s35
      %s24 = sphi 0, %s31
      %s25 = sphi 0, %s23
      %s26 = sphi 0, %s24
      %s27 = sphi 0, %s25
      %s28 = sphi 0, %s26
      %s38 = sphi 0, %s40
      %s41 = sphi 0, %s38
      %s42 = sphi 0, %s41
      %s58 = sphi 0, %s42
      %s62 = sphi 0, %s62
      %s64 = sphi 0, %s62
      %s65 = sphi 0, %s64
      %s79 = sphi 0, %s65
      %s83 = sphi 0, %s83
      %s85 = sphi 0, %s83
      %s86 = sphi 0, %s85
      %s100 = sphi 0, %s86
      %s108 = sphi 0, %s110
      %s111 = sphi 0, %s108
      %s112 = sphi 0, %s111
      %s128 = sphi 0, %s112
    $region4: #{tpu_custom_call.1} parent=1 // loop_header_branch
      %19 = sbr.rel (%p17) target = $region8
    $region5: #{tpu_custom_call.1} parent=1 // loop_body
      %s21 = ssub.s32 %s16, 1
      %s22 = ssub.s32 %s16, 2
      %s29 = sadd.s32 1, %s24
      %p30 = scmp.ge.s32.totalorder %s29, 1
      %s31 = scalar_select %p30, 0, %s29
      %s32 = sadd.s32 1, %s23
      %s33 = scalar_select %p30, %s32, %s23
      %p34 = scmp.ge.s32.totalorder %s33, 2
      %s35 = scalar_select %p34, 0, %s33
      %s36 = ssub.s32 %s23, %s35
      %p37 = scmp.eq.s32.totalorder %s36, 0
      %s39 = sadd.s32 %s38, 1
      %s40 = scalar_select %p37, %s38, %s39
      %p43 = pneg %p37
      %p44 = scmp.eq.s32.totalorder %s16, 1
      %p45 = por %p43, %p44
      %p46 = scmp.ne.s32.totalorder %s38, %s41
      %p47 = scmp.eq.s32.totalorder %s16, 0
      %p48 = por %p46, %p47
      %p49 = scmp.ne.s32.totalorder %s38, %s41
      %p50 = scmp.eq.s32.totalorder %s21, 1
      %p51 = por %p49, %p50
      %p52 = scmp.ne.s32.totalorder %s41, %s42
      %p53 = scmp.eq.s32.totalorder %s21, 0
      %p54 = por %p52, %p53
      %p55 = scmp.ne.s32.totalorder %s41, %s42
      %p56 = scmp.eq.s32.totalorder %s22, 1
      %p57 = por %p55, %p56
      %p59 = scmp.ne.s32.totalorder %s42, %s58
      %p60 = scmp.eq.s32.totalorder %s22, 0
      %p61 = por %p59, %p60
      %s63 = sadd.s32 %s62, 1
      %p66 = scmp.eq.s32.totalorder %s16, 1
      %p67 = scmp.ne.s32.totalorder %s62, %s64
      %p68 = scmp.eq.s32.totalorder %s16, 0
      %p69 = por %p67, %p68
      %p70 = scmp.ne.s32.totalorder %s62, %s64
      %p71 = scmp.eq.s32.totalorder %s21, 1
      %p72 = por %p70, %p71
      %p73 = scmp.ne.s32.totalorder %s64, %s65
      %p74 = scmp.eq.s32.totalorder %s21, 0
      %p75 = por %p73, %p74
      %p76 = scmp.ne.s32.totalorder %s64, %s65
      %p77 = scmp.eq.s32.totalorder %s22, 1
      %p78 = por %p76, %p77
      %p80 = scmp.ne.s32.totalorder %s65, %s79
      %p81 = scmp.eq.s32.totalorder %s22, 0
      %p82 = por %p80, %p81
      %s84 = sadd.s32 %s83, 1
      %p87 = scmp.eq.s32.totalorder %s16, 1
      %p88 = scmp.ne.s32.totalorder %s83, %s85
      %p89 = scmp.eq.s32.totalorder %s16, 0
      %p90 = por %p88, %p89
      %p91 = scmp.ne.s32.totalorder %s83, %s85
      %p92 = scmp.eq.s32.totalorder %s21, 1
      %p93 = por %p91, %p92
      %p94 = scmp.ne.s32.totalorder %s85, %s86
      %p95 = scmp.eq.s32.totalorder %s21, 0
      %p96 = por %p94, %p95
      %p97 = scmp.ne.s32.totalorder %s85, %s86
      %p98 = scmp.eq.s32.totalorder %s22, 1
      %p99 = por %p97, %p98
      %p101 = scmp.ne.s32.totalorder %s86, %s100
      %p102 = scmp.eq.s32.totalorder %s22, 0
      %p103 = por %p101, %p102
      %s104 = ssub.s32 %s23, %s35
      %s105 = ssub.s32 %s24, %s31
      %s106 = sor.u32 %s104, %s105
      %p107 = scmp.eq.s32.totalorder %s106, 0
      %s109 = sadd.s32 %s108, 1
      %s110 = scalar_select %p107, %s108, %s109
      %p113 = pneg %p107
      %p114 = scmp.eq.s32.totalorder %s16, 1
      %p115 = por %p113, %p114
      %p116 = scmp.ne.s32.totalorder %s108, %s111
      %p117 = scmp.eq.s32.totalorder %s16, 0
      %p118 = por %p116, %p117
      %p119 = scmp.ne.s32.totalorder %s108, %s111
      %p120 = scmp.eq.s32.totalorder %s21, 1
      %p121 = por %p119, %p120
      %p122 = scmp.ne.s32.totalorder %s111, %s112
      %p123 = scmp.eq.s32.totalorder %s21, 0
      %p124 = por %p122, %p123
      %p125 = scmp.ne.s32.totalorder %s111, %s112
      %p126 = scmp.eq.s32.totalorder %s22, 1
      %p127 = por %p125, %p126
      %p129 = scmp.ne.s32.totalorder %s112, %s128
      %p130 = scmp.eq.s32.totalorder %s22, 0
      %p131 = por %p129, %p130
      %p132 = scmp.le.s32.totalorder 1, %s16
      %p133 = scmp.lt.s32.totalorder %s16, 3
      %p134 = pnand %p132, %p133
      %p135 = pneg %p134
      // Predicated region
      $region9: #{tpu_custom_call.1} parent=5 // pred_check
        _
      $region10: #{tpu_custom_call.1} parent=5 // pred_check_branch
        %137 = sbr.rel (%p134) target = $region12
      $region11: #{tpu_custom_call.1} parent=5 // pred_region
        %s138 = ssub.s32 %s16, 1
        // Predicated region
        $region13: #{tpu_custom_call.1} parent=11 // pred_check
          %p139 = pneg %p75
        $region14: #{tpu_custom_call.1} parent=11 // pred_check_branch
          %141 = sbr.rel (%p139) target = $region16
        $region15: #{tpu_custom_call.1} parent=11 // pred_region
          %s143 = ssub.s32 512, 512
          %144 = vsyncadd [#allocation10], %s143
          %s145 = sshll.u32 [#allocation9], 4
          %s146 = int_to_ptr.vmem [resolvable:$true] %s145
          %151 = dma.hbm_to_vmem [thread:$0]  %s1, 512, %s146, [#allocation10], 128, 128, 8
        $region16: #{tpu_custom_call.1} parent=11 // pred_fallthru
          _
        // Predicated region
        $region17: #{tpu_custom_call.1} parent=11 // pred_check
          %p152 = pneg %p96
        $region18: #{tpu_custom_call.1} parent=11 // pred_check_branch
          %154 = sbr.rel (%p152) target = $region20
        $region19: #{tpu_custom_call.1} parent=11 // pred_region
          _
        $region20: #{tpu_custom_call.1} parent=11 // pred_fallthru
          _
      $region12: #{tpu_custom_call.1} parent=5 // pred_fallthru
        _
      %p155 = scmp.lt.s32.totalorder %s16, 2
      // Predicated region
      $region21: #{tpu_custom_call.1} parent=5 // pred_check
        %p156 = pneg %p155
      $region22: #{tpu_custom_call.1} parent=5 // pred_check_branch
        %158 = sbr.rel (%p156) target = $region24
      $region23: #{tpu_custom_call.1} parent=5 // pred_region
        // Predicated region
        $region25: #{tpu_custom_call.1} parent=23 // pred_check
          %p159 = pneg %p48
        $region26: #{tpu_custom_call.1} parent=23 // pred_check_branch
          %161 = sbr.rel (%p159) target = $region28
        $region27: #{tpu_custom_call.1} parent=23 // pred_region
          %s162 = sand.u32 %s38, 1
          %s163 = scalar_lea.sflag [#allocation7], %s162
          %s164 = sand.u32 %s38, 1
          %s165 = smul.addr %s164, 8
          %s166 = scalar_lea.vmem [#allocation6], %s165
          %s168 = ssub.s32 128, 128
          %169 = vsyncadd %s163, %s168
          %s170 = smul.addr %s23, 128
          %s171 = scalar_lea.hbm %s0, %s170
          %s173 = sshll.u32 %s166, 4
          %s174 = int_to_ptr.vmem [resolvable:$true] %s173
          %176 = dma.hbm_to_vmem [thread:$0]  %s171, 128, %s174, %s163
        $region28: #{tpu_custom_call.1} parent=23 // pred_fallthru
          _
      $region24: #{tpu_custom_call.1} parent=5 // pred_fallthru
        _
      %p177 = scmp.le.s32.totalorder 1, %s16
      %p178 = scmp.lt.s32.totalorder %s16, 3
      %p179 = pnand %p177, %p178
      %p180 = pneg %p179
      // Predicated region
      $region29: #{tpu_custom_call.1} parent=5 // pred_check
        _
      $region30: #{tpu_custom_call.1} parent=5 // pred_check_branch
        %182 = sbr.rel (%p179) target = $region32
      $region31: #{tpu_custom_call.1} parent=5 // pred_region
        %s183 = ssub.s32 %s16, 1
        %s184 = sand.u32 %s41, 1
        %s185 = scalar_lea.sflag [#allocation7], %s184
        %s186 = sand.u32 %s41, 1
        %s187 = smul.addr %s186, 8
        %s188 = scalar_lea.vmem [#allocation6], %s187
        // Predicated region
        $region33: #{tpu_custom_call.1} parent=31 // pred_check
          %p189 = pneg %p54
        $region34: #{tpu_custom_call.1} parent=31 // pred_check_branch
          %191 = sbr.rel (%p189) target = $region36
        $region35: #{tpu_custom_call.1} parent=31 // pred_region
          %192 = dma.done %s185, 128
        $region36: #{tpu_custom_call.1} parent=31 // pred_fallthru
          _
        // Predicated region
        $region37: #{tpu_custom_call.1} parent=31 // pred_check
          %p193 = pneg %p75
        $region38: #{tpu_custom_call.1} parent=31 // pred_check_branch
          %195 = sbr.rel (%p193) target = $region40
        $region39: #{tpu_custom_call.1} parent=31 // pred_region
          %196 = dma.done [#allocation10], 512
        $region40: #{tpu_custom_call.1} parent=31 // pred_fallthru
          _
        %s197 = sand.u32 %s41, 1
        %s198 = scalar_lea.sflag [#allocation7], %s197
        %s199 = sand.u32 %s41, 1
        %s200 = smul.addr %s199, 8
        %s201 = scalar_lea.vmem [#allocation6], %s200
        %p202 = pneg %p54
        %p203 = pneg %p51
        %p204 = pneg %p75
        %p205 = pneg %p72
        %p206 = pneg %p96
        %p207 = pneg %p93
        %p208 = pneg %p124
        %p209 = pneg %p121
        %s210 = sand.u32 %s111, 1
        %s211 = scalar_lea.sflag [#allocation8], %s210
        %s212 = sand.u32 %s111, 1
        %s213 = smul.addr %s212, 8
        %s214 = scalar_lea.vmem [#allocation11], %s213
        %p215 = scmp.eq.s32.totalorder %s26, 0
        // Predicated region
        $region41: #{tpu_custom_call.1} parent=31 // pred_check
          %p216 = pneg %p215
        $region42: #{tpu_custom_call.1} parent=31 // pred_check_branch
          %218 = sbr.rel (%p216) target = $region44
        $region43: #{tpu_custom_call.1} parent=31 // pred_region
          %v219 = vld [vmem:[%s188] sm:$0xff]
          %v220 = vld [vmem:[#allocation9] sm:$0xff]
          %v221 = vld [vmem:[#allocation9 + $0x8] sm:$0xff]
          %v222 = vld [vmem:[#allocation9 + $0x10] sm:$0xff]
          %v223 = vld [vmem:[#allocation9 + $0x18] sm:$0xff]
          %v224 = vld [vmem:[%s2] sm:$0x1]
          %v226 = vlaneseq
          %v227 = vshrl.u32 %v226, 7
          %v228 = vsub.s32 0, %v227
          %v229 = vrot.slane %v224, %v228
          %vm231 = vcmask 261120
          %v233 = vsel %vm231, %v219, 0
          %235 = vmatprep.subr.mxu0 0.0
          %236 = vmatpush1.msra.mxu0 0.0
          %237 = vmatprep.subr.mxu0 0.0
          %238 = vmatpush1.msra.mxu0 0.0
          %239 = vmatprep.subr.mxu0 0.0
          %240 = vmatpush1.msra.mxu0 0.0
          %241 = vmatprep.subr.mxu0 0.0
          %242 = vmatpush1.msra.mxu0 0.0
          %243 = vmatprep.subr.mxu0 0.0
          %244 = vmatpush1.msra.mxu0 0.0
          %245 = vmatprep.subr.mxu0 0.0
          %246 = vmatpush1.msra.mxu0 0.0
          %247 = vmatprep.subr.mxu0 0.0
          %248 = vmatpush1.msra.mxu0 0.0
          %249 = vmatprep.subr.mxu0 0.0
          %250 = vmatpush1.msra.mxu0 0.0
          %251 = vmatprep.subr.mxu0 0.0
          %252 = vmatpush1.msra.mxu0 0.0
          %253 = vmatprep.subr.mxu0 0.0
          %254 = vmatpush1.msra.mxu0 0.0
          %255 = vmatprep.subr.mxu0 0.0
          %256 = vmatpush1.msra.mxu0 0.0
          %257 = vmatprep.subr.mxu0 0.0
          %258 = vmatpush1.msra.mxu0 0.0
          %259 = vmatprep.subr.mxu0 0.0
          %260 = vmatpush1.msra.mxu0 %v223
          %261 = vmatprep.subr.mxu0 0.0
          %262 = vmatpush1.msra.mxu0 %v222
          %263 = vmatprep.subr.mxu0 0.0
          %264 = vmatpush1.msra.mxu0 %v221
          %265 = vmatprep.subr.mxu0 0.0
          %266 = vmatpush1.msra.mxu0 %v220
          %267 = vmatprep.subr.mxu0 0.0
          %268 = vmatpush2.msra.mxu0 0.0
          %269 = vmatprep.subr.mxu0 0.0
          %270 = vmatpush2.msra.mxu0 0.0
          %271 = vmatprep.subr.mxu0 0.0
          %272 = vmatpush2.msra.mxu0 0.0
          %273 = vmatprep.subr.mxu0 0.0
          %274 = vmatpush2.msra.mxu0 0.0
          %275 = vmatprep.subr.mxu0 0.0
          %276 = vmatpush2.msra.mxu0 0.0
          %277 = vmatprep.subr.mxu0 0.0
          %278 = vmatpush2.msra.mxu0 0.0
          %279 = vmatprep.subr.mxu0 0.0
          %280 = vmatpush2.msra.mxu0 0.0
          %281 = vmatprep.subr.mxu0 0.0
          %282 = vmatpush2.msra.mxu0 0.0
          %283 = vmatprep.subr.mxu0 0.0
          %284 = vmatpush2.msra.mxu0 0.0
          %285 = vmatprep.subr.mxu0 0.0
          %286 = vmatpush2.msra.mxu0 0.0
          %287 = vmatprep.subr.mxu0 0.0
          %288 = vmatpush2.msra.mxu0 0.0
          %289 = vmatprep.subr.mxu0 0.0
          %290 = vmatpush2.msra.mxu0 0.0
          %291 = vmatprep.subr.mxu0 0.0
          %292 = vmatpush2.msra.mxu0 0.0
          %293 = vmatprep.subr.mxu0 0.0
          %294 = vmatpush2.msra.mxu0 0.0
          %295 = vmatprep.subr.mxu0 0.0
          %296 = vmatpush2.msra.mxu0 0.0
          %297 = vmatprep.subr.mxu0 0.0
          %298 = vmatpush2.msra.mxu0 0.0
          %299 = vmatprep.mubr.f32.mxu0 0.0
          %300 = vmatmul.mubr.f32.gmra.mxu0 %v233
          %v301 = vpop.f32.mrf.mxu0
          %v302 = vadd.f32 %v229, %v301
          %v303 = vpop.f32.mrf.mxu0
          %304 = vdwg.mxu0
          %vm305 = vcmask 64512
          %306 = vst.msk [vmem:[#allocation2] sm:$0xff] %vm305, %v302
          %308 = vrot.lane.b32.xlu0 %v302, 96
          %v309 = vpop.permute.xlu0 %308
          %311 = vst.msk [vmem:[#allocation3] sm:$0xff] %vm305, %v309
          %312 = vrot.lane.b32.xlu0 %v302, 64
          %v313 = vpop.permute.xlu0 %312
          %315 = vst.msk [vmem:[#allocation4] sm:$0xff] %vm305, %v313
          %316 = vrot.lane.b32.xlu0 %v302, 120
          %v317 = vpop.permute.xlu0 %316
          %s319 = scalar_lea.vmem [#allocation2], 8
          %320 = vst.msk [vmem:[%s319] sm:$0xff] %vm305, %v317
          %321 = vrot.lane.b32.xlu0 %v302, 88
          %v322 = vpop.permute.xlu0 %321
          %s324 = scalar_lea.vmem [#allocation3], 8
          %325 = vst.msk [vmem:[%s324] sm:$0xff] %vm305, %v322
          %326 = vrot.lane.b32.xlu0 %v302, 56
          %v327 = vpop.permute.xlu0 %326
          %s329 = scalar_lea.vmem [#allocation4], 8
          %330 = vst.msk [vmem:[%s329] sm:$0xff] %vm305, %v327
          %331 = vrot.lane.b32.xlu0 %v302, 112
          %v332 = vpop.permute.xlu0 %331
          %s334 = scalar_lea.vmem [#allocation2], 16
          %335 = vst.msk [vmem:[%s334] sm:$0xff] %vm305, %v332
          %336 = vrot.lane.b32.xlu0 %v302, 80
          %v337 = vpop.permute.xlu0 %336
          %s339 = scalar_lea.vmem [#allocation3], 16
          %340 = vst.msk [vmem:[%s339] sm:$0xff] %vm305, %v337
          %341 = vrot.lane.b32.xlu0 %v302, 48
          %v342 = vpop.permute.xlu0 %341
          %s344 = scalar_lea.vmem [#allocation4], 16
          %345 = vst.msk [vmem:[%s344] sm:$0xff] %vm305, %v342
          %346 = vrot.lane.b32.xlu0 %v302, 104
          %v347 = vpop.permute.xlu0 %346
          %s349 = scalar_lea.vmem [#allocation2], 24
          %350 = vst.msk [vmem:[%s349] sm:$0xff] %vm305, %v347
          %351 = vrot.lane.b32.xlu0 %v302, 72
          %v352 = vpop.permute.xlu0 %351
          %s354 = scalar_lea.vmem [#allocation3], 24
          %355 = vst.msk [vmem:[%s354] sm:$0xff] %vm305, %v352
          %356 = vrot.lane.b32.xlu0 %v302, 40
          %v357 = vpop.permute.xlu0 %356
          %s359 = scalar_lea.vmem [#allocation4], 24
          %360 = vst.msk [vmem:[%s359] sm:$0xff] %vm305, %v357
        $region44: #{tpu_custom_call.1} parent=31 // pred_fallthru
          _
        %s361 = smul.u32 %s26, 8
        %s362 = scalar_lea.vmem [#allocation2], %s361
        %v363 = vld [vmem:[%s362] sm:$0xff]
        %v364 = vld [vmem:[%s362 + $0x8] sm:$0xff]
        %v365 = vld [vmem:[%s362 + $0x10] sm:$0xff]
        %v366 = vld [vmem:[%s362 + $0x18] sm:$0xff]
        %v367 = vld [vmem:[#allocation3] sm:$0xff]
        %v368 = vld [vmem:[#allocation3 + $0x8] sm:$0xff]
        %v369 = vld [vmem:[#allocation3 + $0x10] sm:$0xff]
        %v370 = vld [vmem:[#allocation3 + $0x18] sm:$0xff]
        %v371 = vld [vmem:[#allocation4] sm:$0xff]
        %v372 = vld [vmem:[#allocation4 + $0x8] sm:$0xff]
        %v373 = vld [vmem:[#allocation4 + $0x10] sm:$0xff]
        %v374 = vld [vmem:[#allocation4 + $0x18] sm:$0xff]
        %vm375 = vcmask 64512
        %v377 = vsel %vm375, %v363, 0
        %v380 = vsel %vm375, %v367, 0
        %382 = vmatprep.subr.mxu0 0.0
        %383 = vmatpush1.xpose.msra.mxu0 0.0
        %384 = vmatprep.subr.mxu0 0.0
        %385 = vmatpush1.xpose.msra.mxu0 0.0
        %386 = vmatprep.subr.mxu0 0.0
        %387 = vmatpush1.xpose.msra.mxu0 0.0
        %388 = vmatprep.subr.mxu0 0.0
        %389 = vmatpush1.xpose.msra.mxu0 0.0
        %390 = vmatprep.subr.mxu0 0.0
        %391 = vmatpush1.xpose.msra.mxu0 0.0
        %392 = vmatprep.subr.mxu0 0.0
        %393 = vmatpush1.xpose.msra.mxu0 0.0
        %394 = vmatprep.subr.mxu0 0.0
        %395 = vmatpush1.xpose.msra.mxu0 0.0
        %396 = vmatprep.subr.mxu0 0.0
        %397 = vmatpush1.xpose.msra.mxu0 0.0
        %398 = vmatprep.subr.mxu0 0.0
        %399 = vmatpush1.xpose.msra.mxu0 0.0
        %400 = vmatprep.subr.mxu0 0.0
        %401 = vmatpush1.xpose.msra.mxu0 0.0
        %402 = vmatprep.subr.mxu0 0.0
        %403 = vmatpush1.xpose.msra.mxu0 0.0
        %404 = vmatprep.subr.mxu0 0.0
        %405 = vmatpush1.xpose.msra.mxu0 0.0
        %406 = vmatprep.subr.mxu0 0.0
        %407 = vmatpush1.xpose.msra.mxu0 0.0
        %408 = vmatprep.subr.mxu0 0.0
        %409 = vmatpush1.xpose.msra.mxu0 0.0
        %410 = vmatprep.subr.mxu0 0.0
        %411 = vmatpush1.xpose.msra.mxu0 0.0
        %412 = vmatprep.subr.mxu0 0.0
        %413 = vmatpush1.xpose.msra.mxu0 %v380
        %414 = vmatprep.subr.mxu0 0.0
        %415 = vmatpush2.xpose.msra.mxu0 0.0
        %416 = vmatprep.subr.mxu0 0.0
        %417 = vmatpush2.xpose.msra.mxu0 0.0
        %418 = vmatprep.subr.mxu0 0.0
        %419 = vmatpush2.xpose.msra.mxu0 0.0
        %420 = vmatprep.subr.mxu0 0.0
        %421 = vmatpush2.xpose.msra.mxu0 0.0
        %422 = vmatprep.subr.mxu0 0.0
        %423 = vmatpush2.xpose.msra.mxu0 0.0
        %424 = vmatprep.subr.mxu0 0.0
        %425 = vmatpush2.xpose.msra.mxu0 0.0
        %426 = vmatprep.subr.mxu0 0.0
        %427 = vmatpush2.xpose.msra.mxu0 0.0
        %428 = vmatprep.subr.mxu0 0.0
        %429 = vmatpush2.xpose.msra.mxu0 0.0
        %430 = vmatprep.subr.mxu0 0.0
        %431 = vmatpush2.xpose.msra.mxu0 0.0
        %432 = vmatprep.subr.mxu0 0.0
        %433 = vmatpush2.xpose.msra.mxu0 0.0
        %434 = vmatprep.subr.mxu0 0.0
        %435 = vmatpush2.xpose.msra.mxu0 0.0
        %436 = vmatprep.subr.mxu0 0.0
        %437 = vmatpush2.xpose.msra.mxu0 0.0
        %438 = vmatprep.subr.mxu0 0.0
        %439 = vmatpush2.xpose.msra.mxu0 0.0
        %440 = vmatprep.subr.mxu0 0.0
        %441 = vmatpush2.xpose.msra.mxu0 0.0
        %442 = vmatprep.subr.mxu0 0.0
        %443 = vmatpush2.xpose.msra.mxu0 0.0
        %444 = vmatprep.subr.mxu0 0.0
        %445 = vmatpush2.xpose.msra.mxu0 0.0
        %446 = vmatprep.mubr.f32.mxu0 0.0
        %447 = vmatmul.mubr.f32.gmra.mxu0 %v377
        %v448 = vpop.f32.mrf.mxu0
        %v449 = vadd.f32 0.0, %v448
        %v450 = vpop.f32.mrf.mxu0
        %451 = vdwg.mxu0
        %v453 = vsel %vm375, %v364, 0
        %v456 = vsel %vm375, %v368, 0
        %458 = vmatprep.subr.mxu0 0.0
        %459 = vmatpush1.xpose.msra.mxu0 0.0
        %460 = vmatprep.subr.mxu0 0.0
        %461 = vmatpush1.xpose.msra.mxu0 0.0
        %462 = vmatprep.subr.mxu0 0.0
        %463 = vmatpush1.xpose.msra.mxu0 0.0
        %464 = vmatprep.subr.mxu0 0.0
        %465 = vmatpush1.xpose.msra.mxu0 0.0
        %466 = vmatprep.subr.mxu0 0.0
        %467 = vmatpush1.xpose.msra.mxu0 0.0
        %468 = vmatprep.subr.mxu0 0.0
        %469 = vmatpush1.xpose.msra.mxu0 0.0
        %470 = vmatprep.subr.mxu0 0.0
        %471 = vmatpush1.xpose.msra.mxu0 0.0
        %472 = vmatprep.subr.mxu0 0.0
        %473 = vmatpush1.xpose.msra.mxu0 0.0
        %474 = vmatprep.subr.mxu0 0.0
        %475 = vmatpush1.xpose.msra.mxu0 0.0
        %476 = vmatprep.subr.mxu0 0.0
        %477 = vmatpush1.xpose.msra.mxu0 0.0
        %478 = vmatprep.subr.mxu0 0.0
        %479 = vmatpush1.xpose.msra.mxu0 0.0
        %480 = vmatprep.subr.mxu0 0.0
        %481 = vmatpush1.xpose.msra.mxu0 0.0
        %482 = vmatprep.subr.mxu0 0.0
        %483 = vmatpush1.xpose.msra.mxu0 0.0
        %484 = vmatprep.subr.mxu0 0.0
        %485 = vmatpush1.xpose.msra.mxu0 0.0
        %486 = vmatprep.subr.mxu0 0.0
        %487 = vmatpush1.xpose.msra.mxu0 0.0
        %488 = vmatprep.subr.mxu0 0.0
        %489 = vmatpush1.xpose.msra.mxu0 %v456
        %490 = vmatprep.subr.mxu0 0.0
        %491 = vmatpush2.xpose.msra.mxu0 0.0
        %492 = vmatprep.subr.mxu0 0.0
        %493 = vmatpush2.xpose.msra.mxu0 0.0
        %494 = vmatprep.subr.mxu0 0.0
        %495 = vmatpush2.xpose.msra.mxu0 0.0
        %496 = vmatprep.subr.mxu0 0.0
        %497 = vmatpush2.xpose.msra.mxu0 0.0
        %498 = vmatprep.subr.mxu0 0.0
        %499 = vmatpush2.xpose.msra.mxu0 0.0
        %500 = vmatprep.subr.mxu0 0.0
        %501 = vmatpush2.xpose.msra.mxu0 0.0
        %502 = vmatprep.subr.mxu0 0.0
        %503 = vmatpush2.xpose.msra.mxu0 0.0
        %504 = vmatprep.subr.mxu0 0.0
        %505 = vmatpush2.xpose.msra.mxu0 0.0
        %506 = vmatprep.subr.mxu0 0.0
        %507 = vmatpush2.xpose.msra.mxu0 0.0
        %508 = vmatprep.subr.mxu0 0.0
        %509 = vmatpush2.xpose.msra.mxu0 0.0
        %510 = vmatprep.subr.mxu0 0.0
        %511 = vmatpush2.xpose.msra.mxu0 0.0
        %512 = vmatprep.subr.mxu0 0.0
        %513 = vmatpush2.xpose.msra.mxu0 0.0
        %514 = vmatprep.subr.mxu0 0.0
        %515 = vmatpush2.xpose.msra.mxu0 0.0
        %516 = vmatprep.subr.mxu0 0.0
        %517 = vmatpush2.xpose.msra.mxu0 0.0
        %518 = vmatprep.subr.mxu0 0.0
        %519 = vmatpush2.xpose.msra.mxu0 0.0
        %520 = vmatprep.subr.mxu0 0.0
        %521 = vmatpush2.xpose.msra.mxu0 0.0
        %522 = vmatprep.mubr.f32.mxu0 0.0
        %523 = vmatmul.mubr.f32.gmra.mxu0 %v453
        %v524 = vpop.f32.mrf.mxu0
        %v525 = vadd.f32 0.0, %v524
        %v526 = vpop.f32.mrf.mxu0
        %527 = vdwg.mxu0
        %v529 = vsel %vm375, %v365, 0
        %v532 = vsel %vm375, %v369, 0
        %534 = vmatprep.subr.mxu0 0.0
        %535 = vmatpush1.xpose.msra.mxu0 0.0
        %536 = vmatprep.subr.mxu0 0.0
        %537 = vmatpush1.xpose.msra.mxu0 0.0
        %538 = vmatprep.subr.mxu0 0.0
        %539 = vmatpush1.xpose.msra.mxu0 0.0
        %540 = vmatprep.subr.mxu0 0.0
        %541 = vmatpush1.xpose.msra.mxu0 0.0
        %542 = vmatprep.subr.mxu0 0.0
        %543 = vmatpush1.xpose.msra.mxu0 0.0
        %544 = vmatprep.subr.mxu0 0.0
        %545 = vmatpush1.xpose.msra.mxu0 0.0
        %546 = vmatprep.subr.mxu0 0.0
        %547 = vmatpush1.xpose.msra.mxu0 0.0
        %548 = vmatprep.subr.mxu0 0.0
        %549 = vmatpush1.xpose.msra.mxu0 0.0
        %550 = vmatprep.subr.mxu0 0.0
        %551 = vmatpush1.xpose.msra.mxu0 0.0
        %552 = vmatprep.subr.mxu0 0.0
        %553 = vmatpush1.xpose.msra.mxu0 0.0
        %554 = vmatprep.subr.mxu0 0.0
        %555 = vmatpush1.xpose.msra.mxu0 0.0
        %556 = vmatprep.subr.mxu0 0.0
        %557 = vmatpush1.xpose.msra.mxu0 0.0
        %558 = vmatprep.subr.mxu0 0.0
        %559 = vmatpush1.xpose.msra.mxu0 0.0
        %560 = vmatprep.subr.mxu0 0.0
        %561 = vmatpush1.xpose.msra.mxu0 0.0
        %562 = vmatprep.subr.mxu0 0.0
        %563 = vmatpush1.xpose.msra.mxu0 0.0
        %564 = vmatprep.subr.mxu0 0.0
        %565 = vmatpush1.xpose.msra.mxu0 %v532
        %566 = vmatprep.subr.mxu0 0.0
        %567 = vmatpush2.xpose.msra.mxu0 0.0
        %568 = vmatprep.subr.mxu0 0.0
        %569 = vmatpush2.xpose.msra.mxu0 0.0
        %570 = vmatprep.subr.mxu0 0.0
        %571 = vmatpush2.xpose.msra.mxu0 0.0
        %572 = vmatprep.subr.mxu0 0.0
        %573 = vmatpush2.xpose.msra.mxu0 0.0
        %574 = vmatprep.subr.mxu0 0.0
        %575 = vmatpush2.xpose.msra.mxu0 0.0
        %576 = vmatprep.subr.mxu0 0.0
        %577 = vmatpush2.xpose.msra.mxu0 0.0
        %578 = vmatprep.subr.mxu0 0.0
        %579 = vmatpush2.xpose.msra.mxu0 0.0
        %580 = vmatprep.subr.mxu0 0.0
        %581 = vmatpush2.xpose.msra.mxu0 0.0
        %582 = vmatprep.subr.mxu0 0.0
        %583 = vmatpush2.xpose.msra.mxu0 0.0
        %584 = vmatprep.subr.mxu0 0.0
        %585 = vmatpush2.xpose.msra.mxu0 0.0
        %586 = vmatprep.subr.mxu0 0.0
        %587 = vmatpush2.xpose.msra.mxu0 0.0
        %588 = vmatprep.subr.mxu0 0.0
        %589 = vmatpush2.xpose.msra.mxu0 0.0
        %590 = vmatprep.subr.mxu0 0.0
        %591 = vmatpush2.xpose.msra.mxu0 0.0
        %592 = vmatprep.subr.mxu0 0.0
        %593 = vmatpush2.xpose.msra.mxu0 0.0
        %594 = vmatprep.subr.mxu0 0.0
        %595 = vmatpush2.xpose.msra.mxu0 0.0
        %596 = vmatprep.subr.mxu0 0.0
        %597 = vmatpush2.xpose.msra.mxu0 0.0
        %598 = vmatprep.mubr.f32.mxu0 0.0
        %599 = vmatmul.mubr.f32.gmra.mxu0 %v529
        %v600 = vpop.f32.mrf.mxu0
        %v601 = vadd.f32 0.0, %v600
        %v602 = vpop.f32.mrf.mxu0
        %603 = vdwg.mxu0
        %v605 = vsel %vm375, %v366, 0
        %v608 = vsel %vm375, %v370, 0
        %610 = vmatprep.subr.mxu0 0.0
        %611 = vmatpush1.xpose.msra.mxu0 0.0
        %612 = vmatprep.subr.mxu0 0.0
        %613 = vmatpush1.xpose.msra.mxu0 0.0
        %614 = vmatprep.subr.mxu0 0.0
        %615 = vmatpush1.xpose.msra.mxu0 0.0
        %616 = vmatprep.subr.mxu0 0.0
        %617 = vmatpush1.xpose.msra.mxu0 0.0
        %618 = vmatprep.subr.mxu0 0.0
        %619 = vmatpush1.xpose.msra.mxu0 0.0
        %620 = vmatprep.subr.mxu0 0.0
        %621 = vmatpush1.xpose.msra.mxu0 0.0
        %622 = vmatprep.subr.mxu0 0.0
        %623 = vmatpush1.xpose.msra.mxu0 0.0
        %624 = vmatprep.subr.mxu0 0.0
        %625 = vmatpush1.xpose.msra.mxu0 0.0
        %626 = vmatprep.subr.mxu0 0.0
        %627 = vmatpush1.xpose.msra.mxu0 0.0
        %628 = vmatprep.subr.mxu0 0.0
        %629 = vmatpush1.xpose.msra.mxu0 0.0
        %630 = vmatprep.subr.mxu0 0.0
        %631 = vmatpush1.xpose.msra.mxu0 0.0
        %632 = vmatprep.subr.mxu0 0.0
        %633 = vmatpush1.xpose.msra.mxu0 0.0
        %634 = vmatprep.subr.mxu0 0.0
        %635 = vmatpush1.xpose.msra.mxu0 0.0
        %636 = vmatprep.subr.mxu0 0.0
        %637 = vmatpush1.xpose.msra.mxu0 0.0
        %638 = vmatprep.subr.mxu0 0.0
        %639 = vmatpush1.xpose.msra.mxu0 0.0
        %640 = vmatprep.subr.mxu0 0.0
        %641 = vmatpush1.xpose.msra.mxu0 %v608
        %642 = vmatprep.subr.mxu0 0.0
        %643 = vmatpush2.xpose.msra.mxu0 0.0
        %644 = vmatprep.subr.mxu0 0.0
        %645 = vmatpush2.xpose.msra.mxu0 0.0
        %646 = vmatprep.subr.mxu0 0.0
        %647 = vmatpush2.xpose.msra.mxu0 0.0
        %648 = vmatprep.subr.mxu0 0.0
        %649 = vmatpush2.xpose.msra.mxu0 0.0
        %650 = vmatprep.subr.mxu0 0.0
        %651 = vmatpush2.xpose.msra.mxu0 0.0
        %652 = vmatprep.subr.mxu0 0.0
        %653 = vmatpush2.xpose.msra.mxu0 0.0
        %654 = vmatprep.subr.mxu0 0.0
        %655 = vmatpush2.xpose.msra.mxu0 0.0
        %656 = vmatprep.subr.mxu0 0.0
        %657 = vmatpush2.xpose.msra.mxu0 0.0
        %658 = vmatprep.subr.mxu0 0.0
        %659 = vmatpush2.xpose.msra.mxu0 0.0
        %660 = vmatprep.subr.mxu0 0.0
        %661 = vmatpush2.xpose.msra.mxu0 0.0
        %662 = vmatprep.subr.mxu0 0.0
        %663 = vmatpush2.xpose.msra.mxu0 0.0
        %664 = vmatprep.subr.mxu0 0.0
        %665 = vmatpush2.xpose.msra.mxu0 0.0
        %666 = vmatprep.subr.mxu0 0.0
        %667 = vmatpush2.xpose.msra.mxu0 0.0
        %668 = vmatprep.subr.mxu0 0.0
        %669 = vmatpush2.xpose.msra.mxu0 0.0
        %670 = vmatprep.subr.mxu0 0.0
        %671 = vmatpush2.xpose.msra.mxu0 0.0
        %672 = vmatprep.subr.mxu0 0.0
        %673 = vmatpush2.xpose.msra.mxu0 0.0
        %674 = vmatprep.mubr.f32.mxu0 0.0
        %675 = vmatmul.mubr.f32.gmra.mxu0 %v605
        %v676 = vpop.f32.mrf.mxu0
        %v677 = vadd.f32 0.0, %v676
        %v678 = vpop.f32.mrf.mxu0
        %679 = vdwg.mxu0
        %v680 = vsel %vm375, %v449, -inf
        %681 = vmax.xlane.f32.xlu0 %v680
        %v682 = vpop.xlane.xlu0 %681
        %v683 = vsel %vm375, %v525, -inf
        %684 = vmax.xlane.f32.xlu0 %v683
        %v685 = vpop.xlane.xlu0 %684
        %v686 = vsel %vm375, %v601, -inf
        %687 = vmax.xlane.f32.xlu0 %v686
        %v688 = vpop.xlane.xlu0 %687
        %v689 = vsel %vm375, %v677, -inf
        %690 = vmax.xlane.f32.xlu0 %v689
        %v691 = vpop.xlane.xlu0 %690
        %v692 = vsub.f32 %v449, %v682
        %v693 = vsub.f32 %v525, %v685
        %v694 = vsub.f32 %v601, %v688
        %v695 = vsub.f32 %v677, %v691
        %v696 = vmul.f32 %v692, 1.442695
        %v697 = vpow.pop %v696
        %v698 = vmul.f32 %v693, 1.442695
        %v699 = vpow.pop %v698
        %v700 = vmul.f32 %v694, 1.442695
        %v701 = vpow.pop %v700
        %v702 = vmul.f32 %v695, 1.442695
        %v703 = vpow.pop %v702
        %v704 = vsel %vm375, %v697, 0.0
        %705 = vadd.xlane.f32.xlu0 %v704
        %v706 = vpop.xlane.xlu0 %705
        %v707 = vsel %vm375, %v699, 0.0
        %708 = vadd.xlane.f32.xlu0 %v707
        %v709 = vpop.xlane.xlu0 %708
        %v710 = vsel %vm375, %v701, 0.0
        %711 = vadd.xlane.f32.xlu0 %v710
        %v712 = vpop.xlane.xlu0 %711
        %v713 = vsel %vm375, %v703, 0.0
        %714 = vadd.xlane.f32.xlu0 %v713
        %v715 = vpop.xlane.xlu0 %714
        %v717 = vsel %vm375, %v697, 0
        %719 = vmatprep.subr.mxu0 0.0
        %720 = vmatpush1.msra.mxu0 0.0
        %721 = vmatprep.subr.mxu0 0.0
        %722 = vmatpush1.msra.mxu0 0.0
        %723 = vmatprep.subr.mxu0 0.0
        %724 = vmatpush1.msra.mxu0 0.0
        %725 = vmatprep.subr.mxu0 0.0
        %726 = vmatpush1.msra.mxu0 0.0
        %727 = vmatprep.subr.mxu0 0.0
        %728 = vmatpush1.msra.mxu0 0.0
        %729 = vmatprep.subr.mxu0 0.0
        %730 = vmatpush1.msra.mxu0 0.0
        %731 = vmatprep.subr.mxu0 0.0
        %732 = vmatpush1.msra.mxu0 0.0
        %733 = vmatprep.subr.mxu0 0.0
        %734 = vmatpush1.msra.mxu0 0.0
        %735 = vmatprep.subr.mxu0 0.0
        %736 = vmatpush1.msra.mxu0 0.0
        %737 = vmatprep.subr.mxu0 0.0
        %738 = vmatpush1.msra.mxu0 0.0
        %739 = vmatprep.subr.mxu0 0.0
        %740 = vmatpush1.msra.mxu0 0.0
        %741 = vmatprep.subr.mxu0 0.0
        %742 = vmatpush1.msra.mxu0 0.0
        %743 = vmatprep.subr.mxu0 0.0
        %744 = vmatpush1.msra.mxu0 0.0
        %745 = vmatprep.subr.mxu0 0.0
        %746 = vmatpush1.msra.mxu0 0.0
        %747 = vmatprep.subr.mxu0 0.0
        %748 = vmatpush1.msra.mxu0 0.0
        %749 = vmatprep.subr.mxu0 0.0
        %750 = vmatpush1.msra.mxu0 %v371
        %751 = vmatprep.subr.mxu0 0.0
        %752 = vmatpush2.msra.mxu0 0.0
        %753 = vmatprep.subr.mxu0 0.0
        %754 = vmatpush2.msra.mxu0 0.0
        %755 = vmatprep.subr.mxu0 0.0
        %756 = vmatpush2.msra.mxu0 0.0
        %757 = vmatprep.subr.mxu0 0.0
        %758 = vmatpush2.msra.mxu0 0.0
        %759 = vmatprep.subr.mxu0 0.0
        %760 = vmatpush2.msra.mxu0 0.0
        %761 = vmatprep.subr.mxu0 0.0
        %762 = vmatpush2.msra.mxu0 0.0
        %763 = vmatprep.subr.mxu0 0.0
        %764 = vmatpush2.msra.mxu0 0.0
        %765 = vmatprep.subr.mxu0 0.0
        %766 = vmatpush2.msra.mxu0 0.0
        %767 = vmatprep.subr.mxu0 0.0
        %768 = vmatpush2.msra.mxu0 0.0
        %769 = vmatprep.subr.mxu0 0.0
        %770 = vmatpush2.msra.mxu0 0.0
        %771 = vmatprep.subr.mxu0 0.0
        %772 = vmatpush2.msra.mxu0 0.0
        %773 = vmatprep.subr.mxu0 0.0
        %774 = vmatpush2.msra.mxu0 0.0
        %775 = vmatprep.subr.mxu0 0.0
        %776 = vmatpush2.msra.mxu0 0.0
        %777 = vmatprep.subr.mxu0 0.0
        %778 = vmatpush2.msra.mxu0 0.0
        %779 = vmatprep.subr.mxu0 0.0
        %780 = vmatpush2.msra.mxu0 0.0
        %781 = vmatprep.subr.mxu0 0.0
        %782 = vmatpush2.msra.mxu0 0.0
        %783 = vmatprep.mubr.f32.mxu0 0.0
        %784 = vmatmul.mubr.f32.gmra.mxu0 %v717
        %v785 = vpop.f32.mrf.mxu0
        %v786 = vadd.f32 0.0, %v785
        %v787 = vpop.f32.mrf.mxu0
        %788 = vdwg.mxu0
        %v790 = vsel %vm375, %v699, 0
        %792 = vmatprep.subr.mxu0 0.0
        %793 = vmatpush1.msra.mxu0 0.0
        %794 = vmatprep.subr.mxu0 0.0
        %795 = vmatpush1.msra.mxu0 0.0
        %796 = vmatprep.subr.mxu0 0.0
        %797 = vmatpush1.msra.mxu0 0.0
        %798 = vmatprep.subr.mxu0 0.0
        %799 = vmatpush1.msra.mxu0 0.0
        %800 = vmatprep.subr.mxu0 0.0
        %801 = vmatpush1.msra.mxu0 0.0
        %802 = vmatprep.subr.mxu0 0.0
        %803 = vmatpush1.msra.mxu0 0.0
        %804 = vmatprep.subr.mxu0 0.0
        %805 = vmatpush1.msra.mxu0 0.0
        %806 = vmatprep.subr.mxu0 0.0
        %807 = vmatpush1.msra.mxu0 0.0
        %808 = vmatprep.subr.mxu0 0.0
        %809 = vmatpush1.msra.mxu0 0.0
        %810 = vmatprep.subr.mxu0 0.0
        %811 = vmatpush1.msra.mxu0 0.0
        %812 = vmatprep.subr.mxu0 0.0
        %813 = vmatpush1.msra.mxu0 0.0
        %814 = vmatprep.subr.mxu0 0.0
        %815 = vmatpush1.msra.mxu0 0.0
        %816 = vmatprep.subr.mxu0 0.0
        %817 = vmatpush1.msra.mxu0 0.0
        %818 = vmatprep.subr.mxu0 0.0
        %819 = vmatpush1.msra.mxu0 0.0
        %820 = vmatprep.subr.mxu0 0.0
        %821 = vmatpush1.msra.mxu0 0.0
        %822 = vmatprep.subr.mxu0 0.0
        %823 = vmatpush1.msra.mxu0 %v372
        %824 = vmatprep.subr.mxu0 0.0
        %825 = vmatpush2.msra.mxu0 0.0
        %826 = vmatprep.subr.mxu0 0.0
        %827 = vmatpush2.msra.mxu0 0.0
        %828 = vmatprep.subr.mxu0 0.0
        %829 = vmatpush2.msra.mxu0 0.0
        %830 = vmatprep.subr.mxu0 0.0
        %831 = vmatpush2.msra.mxu0 0.0
        %832 = vmatprep.subr.mxu0 0.0
        %833 = vmatpush2.msra.mxu0 0.0
        %834 = vmatprep.subr.mxu0 0.0
        %835 = vmatpush2.msra.mxu0 0.0
        %836 = vmatprep.subr.mxu0 0.0
        %837 = vmatpush2.msra.mxu0 0.0
        %838 = vmatprep.subr.mxu0 0.0
        %839 = vmatpush2.msra.mxu0 0.0
        %840 = vmatprep.subr.mxu0 0.0
        %841 = vmatpush2.msra.mxu0 0.0
        %842 = vmatprep.subr.mxu0 0.0
        %843 = vmatpush2.msra.mxu0 0.0
        %844 = vmatprep.subr.mxu0 0.0
        %845 = vmatpush2.msra.mxu0 0.0
        %846 = vmatprep.subr.mxu0 0.0
        %847 = vmatpush2.msra.mxu0 0.0
        %848 = vmatprep.subr.mxu0 0.0
        %849 = vmatpush2.msra.mxu0 0.0
        %850 = vmatprep.subr.mxu0 0.0
        %851 = vmatpush2.msra.mxu0 0.0
        %852 = vmatprep.subr.mxu0 0.0
        %853 = vmatpush2.msra.mxu0 0.0
        %854 = vmatprep.subr.mxu0 0.0
        %855 = vmatpush2.msra.mxu0 0.0
        %856 = vmatprep.mubr.f32.mxu0 0.0
        %857 = vmatmul.mubr.f32.gmra.mxu0 %v790
        %v858 = vpop.f32.mrf.mxu0
        %v859 = vadd.f32 0.0, %v858
        %v860 = vpop.f32.mrf.mxu0
        %861 = vdwg.mxu0
        %v863 = vsel %vm375, %v701, 0
        %865 = vmatprep.subr.mxu0 0.0
        %866 = vmatpush1.msra.mxu0 0.0
        %867 = vmatprep.subr.mxu0 0.0
        %868 = vmatpush1.msra.mxu0 0.0
        %869 = vmatprep.subr.mxu0 0.0
        %870 = vmatpush1.msra.mxu0 0.0
        %871 = vmatprep.subr.mxu0 0.0
        %872 = vmatpush1.msra.mxu0 0.0
        %873 = vmatprep.subr.mxu0 0.0
        %874 = vmatpush1.msra.mxu0 0.0
        %875 = vmatprep.subr.mxu0 0.0
        %876 = vmatpush1.msra.mxu0 0.0
        %877 = vmatprep.subr.mxu0 0.0
        %878 = vmatpush1.msra.mxu0 0.0
        %879 = vmatprep.subr.mxu0 0.0
        %880 = vmatpush1.msra.mxu0 0.0
        %881 = vmatprep.subr.mxu0 0.0
        %882 = vmatpush1.msra.mxu0 0.0
        %883 = vmatprep.subr.mxu0 0.0
        %884 = vmatpush1.msra.mxu0 0.0
        %885 = vmatprep.subr.mxu0 0.0
        %886 = vmatpush1.msra.mxu0 0.0
        %887 = vmatprep.subr.mxu0 0.0
        %888 = vmatpush1.msra.mxu0 0.0
        %889 = vmatprep.subr.mxu0 0.0
        %890 = vmatpush1.msra.mxu0 0.0
        %891 = vmatprep.subr.mxu0 0.0
        %892 = vmatpush1.msra.mxu0 0.0
        %893 = vmatprep.subr.mxu0 0.0
        %894 = vmatpush1.msra.mxu0 0.0
        %895 = vmatprep.subr.mxu0 0.0
        %896 = vmatpush1.msra.mxu0 %v373
        %897 = vmatprep.subr.mxu0 0.0
        %898 = vmatpush2.msra.mxu0 0.0
        %899 = vmatprep.subr.mxu0 0.0
        %900 = vmatpush2.msra.mxu0 0.0
        %901 = vmatprep.subr.mxu0 0.0
        %902 = vmatpush2.msra.mxu0 0.0
        %903 = vmatprep.subr.mxu0 0.0
        %904 = vmatpush2.msra.mxu0 0.0
        %905 = vmatprep.subr.mxu0 0.0
        %906 = vmatpush2.msra.mxu0 0.0
        %907 = vmatprep.subr.mxu0 0.0
        %908 = vmatpush2.msra.mxu0 0.0
        %909 = vmatprep.subr.mxu0 0.0
        %910 = vmatpush2.msra.mxu0 0.0
        %911 = vmatprep.subr.mxu0 0.0
        %912 = vmatpush2.msra.mxu0 0.0
        %913 = vmatprep.subr.mxu0 0.0
        %914 = vmatpush2.msra.mxu0 0.0
        %915 = vmatprep.subr.mxu0 0.0
        %916 = vmatpush2.msra.mxu0 0.0
        %917 = vmatprep.subr.mxu0 0.0
        %918 = vmatpush2.msra.mxu0 0.0
        %919 = vmatprep.subr.mxu0 0.0
        %920 = vmatpush2.msra.mxu0 0.0
        %921 = vmatprep.subr.mxu0 0.0
        %922 = vmatpush2.msra.mxu0 0.0
        %923 = vmatprep.subr.mxu0 0.0
        %924 = vmatpush2.msra.mxu0 0.0
        %925 = vmatprep.subr.mxu0 0.0
        %926 = vmatpush2.msra.mxu0 0.0
        %927 = vmatprep.subr.mxu0 0.0
        %928 = vmatpush2.msra.mxu0 0.0
        %929 = vmatprep.mubr.f32.mxu0 0.0
        %930 = vmatmul.mubr.f32.gmra.mxu0 %v863
        %v931 = vpop.f32.mrf.mxu0
        %v932 = vadd.f32 0.0, %v931
        %v933 = vpop.f32.mrf.mxu0
        %934 = vdwg.mxu0
        %v936 = vsel %vm375, %v703, 0
        %938 = vmatprep.subr.mxu0 0.0
        %939 = vmatpush1.msra.mxu0 0.0
        %940 = vmatprep.subr.mxu0 0.0
        %941 = vmatpush1.msra.mxu0 0.0
        %942 = vmatprep.subr.mxu0 0.0
        %943 = vmatpush1.msra.mxu0 0.0
        %944 = vmatprep.subr.mxu0 0.0
        %945 = vmatpush1.msra.mxu0 0.0
        %946 = vmatprep.subr.mxu0 0.0
        %947 = vmatpush1.msra.mxu0 0.0
        %948 = vmatprep.subr.mxu0 0.0
        %949 = vmatpush1.msra.mxu0 0.0
        %950 = vmatprep.subr.mxu0 0.0
        %951 = vmatpush1.msra.mxu0 0.0
        %952 = vmatprep.subr.mxu0 0.0
        %953 = vmatpush1.msra.mxu0 0.0
        %954 = vmatprep.subr.mxu0 0.0
        %955 = vmatpush1.msra.mxu0 0.0
        %956 = vmatprep.subr.mxu0 0.0
        %957 = vmatpush1.msra.mxu0 0.0
        %958 = vmatprep.subr.mxu0 0.0
        %959 = vmatpush1.msra.mxu0 0.0
        %960 = vmatprep.subr.mxu0 0.0
        %961 = vmatpush1.msra.mxu0 0.0
        %962 = vmatprep.subr.mxu0 0.0
        %963 = vmatpush1.msra.mxu0 0.0
        %964 = vmatprep.subr.mxu0 0.0
        %965 = vmatpush1.msra.mxu0 0.0
        %966 = vmatprep.subr.mxu0 0.0
        %967 = vmatpush1.msra.mxu0 0.0
        %968 = vmatprep.subr.mxu0 0.0
        %969 = vmatpush1.msra.mxu0 %v374
        %970 = vmatprep.subr.mxu0 0.0
        %971 = vmatpush2.msra.mxu0 0.0
        %972 = vmatprep.subr.mxu0 0.0
        %973 = vmatpush2.msra.mxu0 0.0
        %974 = vmatprep.subr.mxu0 0.0
        %975 = vmatpush2.msra.mxu0 0.0
        %976 = vmatprep.subr.mxu0 0.0
        %977 = vmatpush2.msra.mxu0 0.0
        %978 = vmatprep.subr.mxu0 0.0
        %979 = vmatpush2.msra.mxu0 0.0
        %980 = vmatprep.subr.mxu0 0.0
        %981 = vmatpush2.msra.mxu0 0.0
        %982 = vmatprep.subr.mxu0 0.0
        %983 = vmatpush2.msra.mxu0 0.0
        %984 = vmatprep.subr.mxu0 0.0
        %985 = vmatpush2.msra.mxu0 0.0
        %986 = vmatprep.subr.mxu0 0.0
        %987 = vmatpush2.msra.mxu0 0.0
        %988 = vmatprep.subr.mxu0 0.0
        %989 = vmatpush2.msra.mxu0 0.0
        %990 = vmatprep.subr.mxu0 0.0
        %991 = vmatpush2.msra.mxu0 0.0
        %992 = vmatprep.subr.mxu0 0.0
        %993 = vmatpush2.msra.mxu0 0.0
        %994 = vmatprep.subr.mxu0 0.0
        %995 = vmatpush2.msra.mxu0 0.0
        %996 = vmatprep.subr.mxu0 0.0
        %997 = vmatpush2.msra.mxu0 0.0
        %998 = vmatprep.subr.mxu0 0.0
        %999 = vmatpush2.msra.mxu0 0.0
        %1000 = vmatprep.subr.mxu0 0.0
        %1001 = vmatpush2.msra.mxu0 0.0
        %1002 = vmatprep.mubr.f32.mxu0 0.0
        %1003 = vmatmul.mubr.f32.gmra.mxu0 %v936
        %v1004 = vpop.f32.mrf.mxu0
        %v1005 = vadd.f32 0.0, %v1004
        %v1006 = vpop.f32.mrf.mxu0
        %1007 = vdwg.mxu0
        %v1008 = vrcp.pop %v706
        %v1009 = vrcp.pop %v709
        %v1010 = vrcp.pop %v712
        %v1011 = vrcp.pop %v715
        %v1012 = vmul.f32 %v786, %v1008
        %v1013 = vmul.f32 %v859, %v1009
        %v1014 = vmul.f32 %v932, %v1010
        %v1015 = vmul.f32 %v1005, %v1011
        %1016 = vst.msk [vmem:[#allocation5] sm:$0xff] %vm375, %v1012
        %1018 = vrot.lane.b32.xlu0 %v1013, 8
        %v1019 = vpop.permute.xlu0 %1018
        %vm1021 = vcmask 130112
        %1022 = vst.msk [vmem:[#allocation5] sm:$0xff] %vm1021, %v1019
        %1024 = vrot.lane.b32.xlu0 %v1014, 16
        %v1025 = vpop.permute.xlu0 %1024
        %vm1027 = vcmask 195712
        %1028 = vst.msk [vmem:[#allocation5] sm:$0xff] %vm1027, %v1025
        %1030 = vrot.lane.b32.xlu0 %v1015, 24
        %v1031 = vpop.permute.xlu0 %1030
        %vm1033 = vcmask 261312
        %1034 = vst.msk [vmem:[#allocation5] sm:$0xff] %vm1033, %v1031
        %v1035 = vld [vmem:[#allocation5] sm:$0xff]
        %vm1036 = vcmask 261120
        %1037 = vst.msk [vmem:[%s214] sm:$0xff] %vm1036, %v1035
        %s1038 = sand.u32 %s111, 1
        %s1039 = scalar_lea.sflag [#allocation8], %s1038
        %s1040 = sand.u32 %s111, 1
        %s1041 = smul.addr %s1040, 8
        %s1042 = scalar_lea.vmem [#allocation11], %s1041
        // Predicated region
        $region45: #{tpu_custom_call.1} parent=31 // pred_check
          %p1043 = pneg %p121
        $region46: #{tpu_custom_call.1} parent=31 // pred_check_branch
          %1045 = sbr.rel (%p1043) target = $region48
        $region47: #{tpu_custom_call.1} parent=31 // pred_region
          %s1047 = ssub.s32 128, 128
          %1048 = vsyncadd %s1039, %s1047
          %s1049 = sadd.s32 %s26, %s25
          %s1050 = smul.addr %s1049, 128
          %s1051 = scalar_lea.hbm %s3, %s1050
          %s1053 = sshll.u32 %s1042, 4
          %s1054 = int_to_ptr.vmem [resolvable:$true] %s1053
          %1056 = dma.vmem_to_hbm [thread:$0]  %s1054, 128, %s1051, %s1039
        $region48: #{tpu_custom_call.1} parent=31 // pred_fallthru
          _
      $region32: #{tpu_custom_call.1} parent=5 // pred_fallthru
        _
      %p1057 = scmp.le.s32.totalorder 2, %s16
      // Predicated region
      $region49: #{tpu_custom_call.1} parent=5 // pred_check
        %p1058 = pneg %p1057
      $region50: #{tpu_custom_call.1} parent=5 // pred_check_branch
        %1060 = sbr.rel (%p1058) target = $region52
      $region51: #{tpu_custom_call.1} parent=5 // pred_region
        %s1061 = ssub.s32 %s16, 2
        // Predicated region
        $region53: #{tpu_custom_call.1} parent=51 // pred_check
          %p1062 = pneg %p127
        $region54: #{tpu_custom_call.1} parent=51 // pred_check_branch
          %1064 = sbr.rel (%p1062) target = $region56
        $region55: #{tpu_custom_call.1} parent=51 // pred_region
          %s1065 = sand.u32 %s112, 1
          %s1066 = scalar_lea.sflag [#allocation8], %s1065
          %s1067 = sand.u32 %s112, 1
          %s1068 = smul.addr %s1067, 8
          %s1069 = scalar_lea.vmem [#allocation11], %s1068
          %1070 = dma.done %s1066, 128
        $region56: #{tpu_custom_call.1} parent=51 // pred_fallthru
          _
      $region52: #{tpu_custom_call.1} parent=5 // pred_fallthru
        _
    $region6: #{tpu_custom_call.1} parent=1 // loop_footer
      %s20 = sadd.s32 1, %s16
    $region7: #{tpu_custom_call.1} parent=1 // loop_footer_branch
      %15 = sbr.rel target = $region3
    $region8: #{tpu_custom_call.1} parent=1 // loop_exit
      _
    %1071 = vsyncpa [#allocation7], 1
    %s1072 = scalar_lea.sflag [#allocation7], 1
    %1073 = vsyncpa %s1072, 1
    %1074 = vsyncpa [#allocation10], 1
    %1075 = vsyncpa [#allocation8], 1
    %s1076 = scalar_lea.sflag [#allocation8], 1
    %1077 = vsyncpa %s1076, 1

</llo_original>
